<compile_context>
chip_gen: v7x
topology: tpu7x:2x2x1
jax: 0.10.0
libtpu: 0.0.40
codegen_flags: <defaults>
</compile_context>

<pallas_src>
import jax
import jax.numpy as jnp
from jax.experimental import pallas as pl
from jax.experimental.pallas import tpu as pltpu

_LANE = 128
_SUBLANE = 8
_VPU_MAX_C = 8   # VPU/MXU crossover; MXU is a different VLIW slot and is safe above this everywhere.


def _vmem_capacity_bytes():
    """Per-core VMEM capacity; falls back to the smallest generation (v7x, 64 MiB)."""
    try:
        cap = int(pltpu.get_tpu_info().vmem_capacity_bytes)
    except Exception:
        cap = 64 * 1024 * 1024
    return max(cap, 64 * 1024 * 1024)


def _largest_divisor_leq(n, k):
    k = max(1, min(n, int(k)))
    while n % k:
        k -= 1
    return k


def _make_vpu_kernel(C):
    """Channel mix as scalar(SMEM) * vector FMAs; works for 3-D or 4-D blocks."""

    def kernel(mt_ref, x_ref, o_ref):
        # mt_ref: (C, C) f32 in SMEM, mt[o, i] = M[i, o]        (scalar reads are free)
        # x_ref / o_ref: (tile_n, C, 8, tile_l) or (tile_n, C, tile_s) in VMEM
        for o in range(C):
            acc = mt_ref[o, 0] * x_ref[:, 0]          # f32 accumulation
            for i in range(1, C):
                acc = acc + mt_ref[o, i] * x_ref[:, i]
            o_ref[:, o] = acc.astype(o_ref.dtype)

    return kernel


def _make_mxu_kernel(tile_n):
    """Channel mix on the MXU with an f32 accumulator."""

    def kernel(mt_ref, x_ref, o_ref):
        mt = mt_ref[...]                               # (C, C)
        for b in range(tile_n):                        # tile_n is small & static
            acc = jnp.dot(mt, x_ref[b],
                          precision=jax.lax.Precision.HIGHEST,
                          preferred_element_type=jnp.float32)
            o_ref[b] = acc.astype(o_ref.dtype)

    return kernel


def _pick_tiles(N, L, unit_bytes, max_block_bytes, target_bytes=1 << 20):
    """Pick (tile_n, tile_l, grid) for blocks of shape (tile_n, ..., tile_l).

    `unit_bytes` = bytes moved per unit of the last (lane) dim per batch element.
    """
    max_l = max(1, max_block_bytes // unit_bytes)
    if L <= max_l:
        tile_l = L                                       # full extent (any size is legal)
    else:
        tile_l = max(_LANE, (max_l // _LANE) * _LANE)    # lane-aligned partial tiles

    spatial_bytes = tile_l * unit_bytes
    n_l = pl.cdiv(L, tile_l)

    if n_l == 1 and N > 1 and spatial_bytes < target_bytes:
        # Small-spatial / large-batch: block over batch too so each grid step
        # still moves ~target_bytes instead of a few KiB.
        want = min(target_bytes // max(spatial_bytes, 1),
                   max_block_bytes // max(spatial_bytes, 1))
        tile_n = _largest_divisor_leq(N, max(1, want))
    else:
        tile_n = 1

    # Keep >= 2 grid steps (feeds both TensorCores on v7x) when there is enough data.
    if (N // tile_n) * n_l < 2:
        if tile_n > 1:
            tile_n = _largest_divisor_leq(N, max(1, tile_n // 2))
        elif L > _LANE and N * L * unit_bytes >= (512 << 10):
            tile_l = min(tile_l, pl.cdiv(pl.cdiv(L, 2), _LANE) * _LANE)
        n_l = pl.cdiv(L, tile_l)

    return tile_n, tile_l, (N // tile_n, n_l)


def fixed_1x1_conv_forward(x_nchw, M, rev=False):
    """Pallas implementation of Fixed1x1Conv.forward([x], rev)[0].

    x_nchw: (N, C, H, W); M: (C, C) mixing matrix (same M as the torch __init__).
    """
    # TODO(synk): cache M^{-1} (and log|det M|) outside the hot path like the torch
    # module's precomputed self.M_inv, instead of inverting on every rev call.
    mat = jnp.linalg.inv(M) if rev else M

    N, C, H, W = (int(d) for d in x_nchw.shape)
    S = H * W
    x_flat = x_nchw.reshape(N, C, S)                    # pure reshape, no copy
    dtype = x_flat.dtype
    itemsize = dtype.itemsize

    # bf16 always goes to the MXU (v5e has no bf16 VPU); f32 with tiny C uses the VPU.
    use_vpu = (C <= _VPU_MAX_C) and dtype == jnp.float32
    mt_vmem_bytes = 0 if use_vpu else 2 * C * C * itemsize   # double-buffered M^T

    # Generation-aware block budget: ~1-8 MiB per block, keeping the pipelined
    # footprint (2x in + 2x out blocks + resident M^T) well inside VMEM.
    vmem_cap = _vmem_capacity_bytes()
    usable = int(vmem_cap * 0.6) - mt_vmem_bytes
    max_block_bytes = int(min(8 << 20, max(1 << 20, usable // 4)))

    if use_vpu and S % _SUBLANE == 0:
        # Sublane-dense layout: each block vreg is fully used even for C < 8.
        L = S // _SUBLANE
        x_in = x_flat.reshape(N, C, _SUBLANE, L)        # free, row-major preserving
        unit_bytes = C * _SUBLANE * itemsize
    else:
        L = S
        x_in = x_flat
        unit_bytes = C * itemsize

    tile_n, tile_l, grid = _pick_tiles(N, L, unit_bytes, max_block_bytes)

    if x_in.ndim == 4:
        block = (tile_n, C, _SUBLANE, tile_l)
        index_map = lambda n, l: (n, 0, 0, l)
    else:
        block = (tile_n, C, tile_l)
        index_map = lambda n, l: (n, 0, l)

    if use_vpu:
        Mt = mat.T.astype(jnp.float32)                  # Mt[o, i] = M[i, o]
        mt_spec = pl.BlockSpec(memory_space=pltpu.MemorySpace.SMEM)
        kernel = _make_vpu_kernel(C)
    else:
        Mt = mat.T.astype(dtype)
        # TODO(synk): tile the output-channel dim (and single-buffer M^T) once
        # 2*C^2*itemsize stops being a negligible slice of VMEM (C >~ 2048).
        mt_spec = pl.BlockSpec((C, C), lambda n, l: (0, 0))
        kernel = _make_mxu_kernel(tile_n)

    block_bytes = tile_n * tile_l * unit_bytes
    vmem_need = 4 * block_bytes + mt_vmem_bytes         # double-buffered in + out
    vmem_limit = int(min(int(vmem_cap * 0.9),
                         max(32 << 20, vmem_need + (4 << 20))))

    y = pl.pallas_call(
        kernel,
        out_shape=jax.ShapeDtypeStruct(x_in.shape, dtype),
        grid_spec=pltpu.PrefetchScalarGridSpec(
            num_scalar_prefetch=0,
            grid=grid,
            in_specs=[mt_spec, pl.BlockSpec(block, index_map)],
            out_specs=pl.BlockSpec(block, index_map),
        ),
        compiler_params=pltpu.CompilerParams(
            dimension_semantics=("parallel", "parallel"),
            vmem_limit_bytes=vmem_limit,
        ),
    )(Mt, x_in)

    return y.reshape(N, C, H, W)


if __name__ == "__main__":
    key = jax.random.PRNGKey(0)
    kx, km, kx2, km2, kx3, km3 = jax.random.split(key, 6)

    # --- primary test: module-consistent small shapes (sublane-dense VPU path) ---
    N, C, H, W = 2, 4, 16, 16
    x = jax.random.normal(kx, (N, C, H, W), dtype=jnp.float32)
    M = jax.random.normal(km, (C, C), dtype=jnp.float32) * 0.1 + jnp.eye(C, dtype=jnp.float32)

    y = jax.block_until_ready(fixed_1x1_conv_forward(x, M, rev=False))
    y_ref = jnp.einsum("nihw,io->nohw", x, M)
    assert y.shape == (N, C, H, W)
    assert jnp.allclose(y, y_ref, atol=1e-5, rtol=1e-5)

    # rev=True applies M^{-1}; round-trip recovers x.
    x_rec = jax.block_until_ready(fixed_1x1_conv_forward(y, M, rev=True))
    assert jnp.allclose(x_rec, x, atol=1e-4, rtol=1e-4)

    # --- ragged spatial size (H*W % 8 != 0): un-padded, full-extent block path ---
    N2, C2, H2, W2 = 1, 3, 5, 7
    x2 = jax.random.normal(kx2, (N2, C2, H2, W2), dtype=jnp.float32)
    M2 = jax.random.normal(km2, (C2, C2), dtype=jnp.float32) * 0.1 + jnp.eye(C2, dtype=jnp.float32)
    y2 = jax.block_until_ready(fixed_1x1_conv_forward(x2, M2, rev=False))
    y2_ref = jnp.einsum("nihw,io->nohw", x2, M2)
    assert jnp.allclose(y2, y2_ref, atol=1e-5, rtol=1e-5)

    # --- larger channel count: MXU path ---
    N3, C3, H3, W3 = 2, 32, 8, 8
    x3 = jax.random.normal(kx3, (N3, C3, H3, W3), dtype=jnp.float32)
    M3 = jax.random.normal(km3, (C3, C3), dtype=jnp.float32) * 0.05 + jnp.eye(C3, dtype=jnp.float32)
    y3 = jax.block_until_ready(fixed_1x1_conv_forward(x3, M3, rev=False))
    y3_ref = jnp.einsum("nihw,io->nohw", x3, M3)
    assert jnp.allclose(y3, y3_ref, atol=1e-2, rtol=1e-2)

    print("KERNEL_OK")
</pallas_src>

<mosaic_0001>
module attributes {stable_mosaic.version = 11 : i64} {
  func.func @kernel(%arg0: i32, %arg1: i32, %arg2: memref<4x4xf32, #tpu.memory_space<smem>>, %arg3: memref<1x4x8x32xf32, #tpu.memory_space<vmem>>, %arg4: memref<1x4x8x32xf32, #tpu.memory_space<vmem>>) attributes {dimension_semantics = [#tpu.dimension_semantics<parallel>, #tpu.dimension_semantics<parallel>], iteration_bounds = array<i64: 2, 1>, scalar_prefetch = 0 : i64, scratch_operands = 0 : i64, tpu.core_type = #tpu.core_type<tc>, window_params = [{transform_indices = @transform_0, window_bounds = array<i64: 4, 4>}, {transform_indices = @transform_1, window_bounds = array<i64: 1, 4, 8, 32>}, {transform_indices = @transform_2, window_bounds = array<i64: 1, 4, 8, 32>}]} {
    %c0 = arith.constant 0 : index
    %c0_0 = arith.constant 0 : index
    %0 = memref.load %arg2[%c0, %c0_0] : memref<4x4xf32, #tpu.memory_space<smem>>
    %c0_1 = arith.constant 0 : index
    %c0_2 = arith.constant 0 : index
    %c0_3 = arith.constant 0 : index
    %c0_4 = arith.constant 0 : index
    %1 = vector.load %arg3[%c0_1, %c0_2, %c0_3, %c0_4] : memref<1x4x8x32xf32, #tpu.memory_space<vmem>>, vector<1x1x8x32xf32>
    %2 = vector.shape_cast %1 : vector<1x1x8x32xf32> to vector<1x8x32xf32>
    %3 = vector.broadcast %0 : f32 to vector<1x8x32xf32>
    %4 = arith.mulf %3, %2 : vector<1x8x32xf32>
    %c0_5 = arith.constant 0 : index
    %c1 = arith.constant 1 : index
    %5 = memref.load %arg2[%c0_5, %c1] : memref<4x4xf32, #tpu.memory_space<smem>>
    %c0_6 = arith.constant 0 : index
    %c1_7 = arith.constant 1 : index
    %c0_8 = arith.constant 0 : index
    %c0_9 = arith.constant 0 : index
    %6 = vector.load %arg3[%c0_6, %c1_7, %c0_8, %c0_9] : memref<1x4x8x32xf32, #tpu.memory_space<vmem>>, vector<1x1x8x32xf32>
    %7 = vector.shape_cast %6 : vector<1x1x8x32xf32> to vector<1x8x32xf32>
    %8 = vector.broadcast %5 : f32 to vector<1x8x32xf32>
    %9 = arith.mulf %8, %7 : vector<1x8x32xf32>
    %10 = arith.addf %4, %9 : vector<1x8x32xf32>
    %c0_10 = arith.constant 0 : index
    %c2 = arith.constant 2 : index
    %11 = memref.load %arg2[%c0_10, %c2] : memref<4x4xf32, #tpu.memory_space<smem>>
    %c0_11 = arith.constant 0 : index
    %c2_12 = arith.constant 2 : index
    %c0_13 = arith.constant 0 : index
    %c0_14 = arith.constant 0 : index
    %12 = vector.load %arg3[%c0_11, %c2_12, %c0_13, %c0_14] : memref<1x4x8x32xf32, #tpu.memory_space<vmem>>, vector<1x1x8x32xf32>
    %13 = vector.shape_cast %12 : vector<1x1x8x32xf32> to vector<1x8x32xf32>
    %14 = vector.broadcast %11 : f32 to vector<1x8x32xf32>
    %15 = arith.mulf %14, %13 : vector<1x8x32xf32>
    %16 = arith.addf %10, %15 : vector<1x8x32xf32>
    %c0_15 = arith.constant 0 : index
    %c3 = arith.constant 3 : index
    %17 = memref.load %arg2[%c0_15, %c3] : memref<4x4xf32, #tpu.memory_space<smem>>
    %c0_16 = arith.constant 0 : index
    %c3_17 = arith.constant 3 : index
    %c0_18 = arith.constant 0 : index
    %c0_19 = arith.constant 0 : index
    %18 = vector.load %arg3[%c0_16, %c3_17, %c0_18, %c0_19] : memref<1x4x8x32xf32, #tpu.memory_space<vmem>>, vector<1x1x8x32xf32>
    %19 = vector.shape_cast %18 : vector<1x1x8x32xf32> to vector<1x8x32xf32>
    %20 = vector.broadcast %17 : f32 to vector<1x8x32xf32>
    %21 = arith.mulf %20, %19 : vector<1x8x32xf32>
    %22 = arith.addf %16, %21 : vector<1x8x32xf32>
    %c0_20 = arith.constant 0 : index
    %c0_21 = arith.constant 0 : index
    %c0_22 = arith.constant 0 : index
    %c0_23 = arith.constant 0 : index
    %23 = vector.load %arg4[%c0_20, %c0_21, %c0_22, %c0_23] : memref<1x4x8x32xf32, #tpu.memory_space<vmem>>, vector<1x1x8x32xf32>
    %24 = vector.shape_cast %23 : vector<1x1x8x32xf32> to vector<1x8x32xf32>
    %25 = vector.shape_cast %22 : vector<1x8x32xf32> to vector<1x1x8x32xf32>
    tpu.vector_store %arg4[%c0_20, %c0_21, %c0_22, %c0_23], %25 {strides = array<i32>} : memref<1x4x8x32xf32, #tpu.memory_space<vmem>>, vector<1x1x8x32xf32>,
    %c1_24 = arith.constant 1 : index
    %c0_25 = arith.constant 0 : index
    %26 = memref.load %arg2[%c1_24, %c0_25] : memref<4x4xf32, #tpu.memory_space<smem>>
    %c0_26 = arith.constant 0 : index
    %c0_27 = arith.constant 0 : index
    %c0_28 = arith.constant 0 : index
    %c0_29 = arith.constant 0 : index
    %27 = vector.load %arg3[%c0_26, %c0_27, %c0_28, %c0_29] : memref<1x4x8x32xf32, #tpu.memory_space<vmem>>, vector<1x1x8x32xf32>
    %28 = vector.shape_cast %27 : vector<1x1x8x32xf32> to vector<1x8x32xf32>
    %29 = vector.broadcast %26 : f32 to vector<1x8x32xf32>
    %30 = arith.mulf %29, %28 : vector<1x8x32xf32>
    %c1_30 = arith.constant 1 : index
    %c1_31 = arith.constant 1 : index
    %31 = memref.load %arg2[%c1_30, %c1_31] : memref<4x4xf32, #tpu.memory_space<smem>>
    %c0_32 = arith.constant 0 : index
    %c1_33 = arith.constant 1 : index
    %c0_34 = arith.constant 0 : index
    %c0_35 = arith.constant 0 : index
    %32 = vector.load %arg3[%c0_32, %c1_33, %c0_34, %c0_35] : memref<1x4x8x32xf32, #tpu.memory_space<vmem>>, vector<1x1x8x32xf32>
    %33 = vector.shape_cast %32 : vector<1x1x8x32xf32> to vector<1x8x32xf32>
    %34 = vector.broadcast %31 : f32 to vector<1x8x32xf32>
    %35 = arith.mulf %34, %33 : vector<1x8x32xf32>
    %36 = arith.addf %30, %35 : vector<1x8x32xf32>
    %c1_36 = arith.constant 1 : index
    %c2_37 = arith.constant 2 : index
    %37 = memref.load %arg2[%c1_36, %c2_37] : memref<4x4xf32, #tpu.memory_space<smem>>
    %c0_38 = arith.constant 0 : index
    %c2_39 = arith.constant 2 : index
    %c0_40 = arith.constant 0 : index
    %c0_41 = arith.constant 0 : index
    %38 = vector.load %arg3[%c0_38, %c2_39, %c0_40, %c0_41] : memref<1x4x8x32xf32, #tpu.memory_space<vmem>>, vector<1x1x8x32xf32>
    %39 = vector.shape_cast %38 : vector<1x1x8x32xf32> to vector<1x8x32xf32>
    %40 = vector.broadcast %37 : f32 to vector<1x8x32xf32>
    %41 = arith.mulf %40, %39 : vector<1x8x32xf32>
    %42 = arith.addf %36, %41 : vector<1x8x32xf32>
    %c1_42 = arith.constant 1 : index
    %c3_43 = arith.constant 3 : index
    %43 = memref.load %arg2[%c1_42, %c3_43] : memref<4x4xf32, #tpu.memory_space<smem>>
    %c0_44 = arith.constant 0 : index
    %c3_45 = arith.constant 3 : index
    %c0_46 = arith.constant 0 : index
    %c0_47 = arith.constant 0 : index
    %44 = vector.load %arg3[%c0_44, %c3_45, %c0_46, %c0_47] : memref<1x4x8x32xf32, #tpu.memory_space<vmem>>, vector<1x1x8x32xf32>
    %45 = vector.shape_cast %44 : vector<1x1x8x32xf32> to vector<1x8x32xf32>
    %46 = vector.broadcast %43 : f32 to vector<1x8x32xf32>
    %47 = arith.mulf %46, %45 : vector<1x8x32xf32>
    %48 = arith.addf %42, %47 : vector<1x8x32xf32>
    %c0_48 = arith.constant 0 : index
    %c1_49 = arith.constant 1 : index
    %c0_50 = arith.constant 0 : index
    %c0_51 = arith.constant 0 : index
    %49 = vector.load %arg4[%c0_48, %c1_49, %c0_50, %c0_51] : memref<1x4x8x32xf32, #tpu.memory_space<vmem>>, vector<1x1x8x32xf32>
    %50 = vector.shape_cast %49 : vector<1x1x8x32xf32> to vector<1x8x32xf32>
    %51 = vector.shape_cast %48 : vector<1x8x32xf32> to vector<1x1x8x32xf32>
    tpu.vector_store %arg4[%c0_48, %c1_49, %c0_50, %c0_51], %51 {strides = array<i32>} : memref<1x4x8x32xf32, #tpu.memory_space<vmem>>, vector<1x1x8x32xf32>,
    %c2_52 = arith.constant 2 : index
    %c0_53 = arith.constant 0 : index
    %52 = memref.load %arg2[%c2_52, %c0_53] : memref<4x4xf32, #tpu.memory_space<smem>>
    %c0_54 = arith.constant 0 : index
    %c0_55 = arith.constant 0 : index
    %c0_56 = arith.constant 0 : index
    %c0_57 = arith.constant 0 : index
    %53 = vector.load %arg3[%c0_54, %c0_55, %c0_56, %c0_57] : memref<1x4x8x32xf32, #tpu.memory_space<vmem>>, vector<1x1x8x32xf32>
    %54 = vector.shape_cast %53 : vector<1x1x8x32xf32> to vector<1x8x32xf32>
    %55 = vector.broadcast %52 : f32 to vector<1x8x32xf32>
    %56 = arith.mulf %55, %54 : vector<1x8x32xf32>
    %c2_58 = arith.constant 2 : index
    %c1_59 = arith.constant 1 : index
    %57 = memref.load %arg2[%c2_58, %c1_59] : memref<4x4xf32, #tpu.memory_space<smem>>
    %c0_60 = arith.constant 0 : index
    %c1_61 = arith.constant 1 : index
    %c0_62 = arith.constant 0 : index
    %c0_63 = arith.constant 0 : index
    %58 = vector.load %arg3[%c0_60, %c1_61, %c0_62, %c0_63] : memref<1x4x8x32xf32, #tpu.memory_space<vmem>>, vector<1x1x8x32xf32>
    %59 = vector.shape_cast %58 : vector<1x1x8x32xf32> to vector<1x8x32xf32>
    %60 = vector.broadcast %57 : f32 to vector<1x8x32xf32>
    %61 = arith.mulf %60, %59 : vector<1x8x32xf32>
    %62 = arith.addf %56, %61 : vector<1x8x32xf32>
    %c2_64 = arith.constant 2 : index
    %c2_65 = arith.constant 2 : index
    %63 = memref.load %arg2[%c2_64, %c2_65] : memref<4x4xf32, #tpu.memory_space<smem>>
    %c0_66 = arith.constant 0 : index
    %c2_67 = arith.constant 2 : index
    %c0_68 = arith.constant 0 : index
    %c0_69 = arith.constant 0 : index
    %64 = vector.load %arg3[%c0_66, %c2_67, %c0_68, %c0_69] : memref<1x4x8x32xf32, #tpu.memory_space<vmem>>, vector<1x1x8x32xf32>
    %65 = vector.shape_cast %64 : vector<1x1x8x32xf32> to vector<1x8x32xf32>
    %66 = vector.broadcast %63 : f32 to vector<1x8x32xf32>
    %67 = arith.mulf %66, %65 : vector<1x8x32xf32>
    %68 = arith.addf %62, %67 : vector<1x8x32xf32>
    %c2_70 = arith.constant 2 : index
    %c3_71 = arith.constant 3 : index
    %69 = memref.load %arg2[%c2_70, %c3_71] : memref<4x4xf32, #tpu.memory_space<smem>>
    %c0_72 = arith.constant 0 : index
    %c3_73 = arith.constant 3 : index
    %c0_74 = arith.constant 0 : index
    %c0_75 = arith.constant 0 : index
    %70 = vector.load %arg3[%c0_72, %c3_73, %c0_74, %c0_75] : memref<1x4x8x32xf32, #tpu.memory_space<vmem>>, vector<1x1x8x32xf32>
    %71 = vector.shape_cast %70 : vector<1x1x8x32xf32> to vector<1x8x32xf32>
    %72 = vector.broadcast %69 : f32 to vector<1x8x32xf32>
    %73 = arith.mulf %72, %71 : vector<1x8x32xf32>
    %74 = arith.addf %68, %73 : vector<1x8x32xf32>
    %c0_76 = arith.constant 0 : index
    %c2_77 = arith.constant 2 : index
    %c0_78 = arith.constant 0 : index
    %c0_79 = arith.constant 0 : index
    %75 = vector.load %arg4[%c0_76, %c2_77, %c0_78, %c0_79] : memref<1x4x8x32xf32, #tpu.memory_space<vmem>>, vector<1x1x8x32xf32>
    %76 = vector.shape_cast %75 : vector<1x1x8x32xf32> to vector<1x8x32xf32>
    %77 = vector.shape_cast %74 : vector<1x8x32xf32> to vector<1x1x8x32xf32>
    tpu.vector_store %arg4[%c0_76, %c2_77, %c0_78, %c0_79], %77 {strides = array<i32>} : memref<1x4x8x32xf32, #tpu.memory_space<vmem>>, vector<1x1x8x32xf32>,
    %c3_80 = arith.constant 3 : index
    %c0_81 = arith.constant 0 : index
    %78 = memref.load %arg2[%c3_80, %c0_81] : memref<4x4xf32, #tpu.memory_space<smem>>
    %c0_82 = arith.constant 0 : index
    %c0_83 = arith.constant 0 : index
    %c0_84 = arith.constant 0 : index
    %c0_85 = arith.constant 0 : index
    %79 = vector.load %arg3[%c0_82, %c0_83, %c0_84, %c0_85] : memref<1x4x8x32xf32, #tpu.memory_space<vmem>>, vector<1x1x8x32xf32>
    %80 = vector.shape_cast %79 : vector<1x1x8x32xf32> to vector<1x8x32xf32>
    %81 = vector.broadcast %78 : f32 to vector<1x8x32xf32>
    %82 = arith.mulf %81, %80 : vector<1x8x32xf32>
    %c3_86 = arith.constant 3 : index
    %c1_87 = arith.constant 1 : index
    %83 = memref.load %arg2[%c3_86, %c1_87] : memref<4x4xf32, #tpu.memory_space<smem>>
    %c0_88 = arith.constant 0 : index
    %c1_89 = arith.constant 1 : index
    %c0_90 = arith.constant 0 : index
    %c0_91 = arith.constant 0 : index
    %84 = vector.load %arg3[%c0_88, %c1_89, %c0_90, %c0_91] : memref<1x4x8x32xf32, #tpu.memory_space<vmem>>, vector<1x1x8x32xf32>
    %85 = vector.shape_cast %84 : vector<1x1x8x32xf32> to vector<1x8x32xf32>
    %86 = vector.broadcast %83 : f32 to vector<1x8x32xf32>
    %87 = arith.mulf %86, %85 : vector<1x8x32xf32>
    %88 = arith.addf %82, %87 : vector<1x8x32xf32>
    %c3_92 = arith.constant 3 : index
    %c2_93 = arith.constant 2 : index
    %89 = memref.load %arg2[%c3_92, %c2_93] : memref<4x4xf32, #tpu.memory_space<smem>>
    %c0_94 = arith.constant 0 : index
    %c2_95 = arith.constant 2 : index
    %c0_96 = arith.constant 0 : index
    %c0_97 = arith.constant 0 : index
    %90 = vector.load %arg3[%c0_94, %c2_95, %c0_96, %c0_97] : memref<1x4x8x32xf32, #tpu.memory_space<vmem>>, vector<1x1x8x32xf32>
    %91 = vector.shape_cast %90 : vector<1x1x8x32xf32> to vector<1x8x32xf32>
    %92 = vector.broadcast %89 : f32 to vector<1x8x32xf32>
    %93 = arith.mulf %92, %91 : vector<1x8x32xf32>
    %94 = arith.addf %88, %93 : vector<1x8x32xf32>
    %c3_98 = arith.constant 3 : index
    %c3_99 = arith.constant 3 : index
    %95 = memref.load %arg2[%c3_98, %c3_99] : memref<4x4xf32, #tpu.memory_space<smem>>
    %c0_100 = arith.constant 0 : index
    %c3_101 = arith.constant 3 : index
    %c0_102 = arith.constant 0 : index
    %c0_103 = arith.constant 0 : index
    %96 = vector.load %arg3[%c0_100, %c3_101, %c0_102, %c0_103] : memref<1x4x8x32xf32, #tpu.memory_space<vmem>>, vector<1x1x8x32xf32>
    %97 = vector.shape_cast %96 : vector<1x1x8x32xf32> to vector<1x8x32xf32>
    %98 = vector.broadcast %95 : f32 to vector<1x8x32xf32>
    %99 = arith.mulf %98, %97 : vector<1x8x32xf32>
    %100 = arith.addf %94, %99 : vector<1x8x32xf32>
    %c0_104 = arith.constant 0 : index
    %c3_105 = arith.constant 3 : index
    %c0_106 = arith.constant 0 : index
    %c0_107 = arith.constant 0 : index
    %101 = vector.load %arg4[%c0_104, %c3_105, %c0_106, %c0_107] : memref<1x4x8x32xf32, #tpu.memory_space<vmem>>, vector<1x1x8x32xf32>
    %102 = vector.shape_cast %101 : vector<1x1x8x32xf32> to vector<1x8x32xf32>
    %103 = vector.shape_cast %100 : vector<1x8x32xf32> to vector<1x1x8x32xf32>
    tpu.vector_store %arg4[%c0_104, %c3_105, %c0_106, %c0_107], %103 {strides = array<i32>} : memref<1x4x8x32xf32, #tpu.memory_space<vmem>>, vector<1x1x8x32xf32>,
    return
  }
  func.func @transform_0(%arg0: i32, %arg1: i32) -> (i32, i32) {
    %c0_i32 = arith.constant 0 : i32
    %c0_i32_0 = arith.constant 0 : i32
    %c0_i32_1 = arith.constant 0 : i32
    return %c0_i32, %c0_i32_0 : i32, i32
  }
  func.func @transform_1(%arg0: i32, %arg1: i32) -> (i32, i32, i32, i32) {
    %c0_i32 = arith.constant 0 : i32
    %c0_i32_0 = arith.constant 0 : i32
    %c0_i32_1 = arith.constant 0 : i32
    return %arg0, %c0_i32, %c0_i32_0, %arg1 : i32, i32, i32, i32
  }
  func.func @transform_2(%arg0: i32, %arg1: i32) -> (i32, i32, i32, i32) {
    %c0_i32 = arith.constant 0 : i32
    %c0_i32_0 = arith.constant 0 : i32
    %c0_i32_1 = arith.constant 0 : i32
    return %arg0, %c0_i32, %c0_i32_0, %arg1 : i32, i32, i32, i32
  }
}

</mosaic_0001>

<llo_original>
// kernel: tpu_custom_call.1
$region0: #{tpu_custom_call.1}
  #allocation0 [shape = 'u32[]', space=smem, size = 0x4, offset = 0x4, fixed_abs, tag = 'smem constant byte address 0x4 - core index']
  #allocation1 [shape = 'u32[144,128]{1,0:T(1,128)}', space=vmem, size = 0x12000, scoped, tag = 'internal scratch']
  %s0 = inlined_call_operand.hbm [shape: f32[4,4], index: 0, kind: input, shape index: {}]
  %s1 = inlined_call_operand.hbm [shape: f32[2,4,8,32], index: 1, kind: input, shape index: {}]
  %s2 = inlined_call_operand.hbm [shape: f32[2,4,8,32], index: 2, kind: output, shape index: {}]
  %s3 = sld [smem:[#allocation0]]
  $region49: #{tpu_custom_call.1} parent=0
    _
  %s5 = ssub.s32 1, %s3
  %s6 = scalar_select 0, %s5, %s3
  $region1: #{tpu_custom_call.1} parent=0
    #allocation2 [shape = 'u8[2048]{0}', space=smem, size = 0x800, scoped, tag = 'input window, operand 0, single buffered']
    #allocation3 [shape = 's32[2]{0}', space=sflag, size = 0x8, scoped, tag = 'scoped memory for tpu_custom_call.1']
    #allocation4 [shape = 's32[2]{0}', space=sflag, size = 0x8, scoped, tag = 'scoped memory for tpu_custom_call.1']
    #allocation5 [shape = 's32[2]{0}', space=sflag, size = 0x8, scoped, tag = 'scoped memory for tpu_custom_call.1']
    #allocation6 [shape = 'u8[32768]{0}', space=vmem, size = 0x8000, scoped, tag = 'input window, operand 1']
    #allocation7 [shape = 'u8[32768]{0}', space=vmem, size = 0x8000, scoped, tag = 'output window, operand 0']
    %7 = vsyncpa [#allocation5], 0
    %8 = vsyncpa [#allocation3], 0
    %s9 = scalar_lea.sflag [#allocation3], 1
    %10 = vsyncpa %s9, 0
    %11 = vsyncpa [#allocation4], 0
    %s12 = scalar_lea.sflag [#allocation4], 1
    %13 = vsyncpa %s12, 0
    loop: start=0, step=1, limit=4
    $region2: #{tpu_custom_call.1} parent=1 // loop_pre_header
      _
    $region3: #{tpu_custom_call.1} parent=1 // loop_header
      %s15 = sphi 0, %s19
      %p16 = scmp.ge.s32.totalorder %s15, 4
      %s22 = sphi 0, %s34
      %s23 = sphi 0, %s30
      %s24 = sphi 0, %s22
      %s25 = sphi 0, %s23
      %s26 = sphi 0, %s24
      %s27 = sphi 0, %s25
      %s35 = sphi 0, %s35
      %s37 = sphi 0, %s35
      %s38 = sphi 0, %s37
      %s52 = sphi 0, %s38
      %s60 = sphi 0, %s62
      %s63 = sphi 0, %s60
      %s64 = sphi 0, %s63
      %s80 = sphi 0, %s64
      %s88 = sphi 0, %s90
      %s91 = sphi 0, %s88
      %s92 = sphi 0, %s91
      %s108 = sphi 0, %s92
    $region4: #{tpu_custom_call.1} parent=1 // loop_header_branch
      %18 = sbr.rel (%p16) target = $region8
    $region5: #{tpu_custom_call.1} parent=1 // loop_body
      %s20 = ssub.s32 %s15, 1
      %s21 = ssub.s32 %s15, 2
      %s28 = sadd.s32 1, %s23
      %p29 = scmp.ge.s32.totalorder %s28, 1
      %s30 = scalar_select %p29, 0, %s28
      %s31 = sadd.s32 1, %s22
      %s32 = scalar_select %p29, %s31, %s22
      %p33 = scmp.ge.s32.totalorder %s32, 2
      %s34 = scalar_select %p33, 0, %s32
      %s36 = sadd.s32 %s35, 1
      %p39 = scmp.eq.s32.totalorder %s15, 1
      %p40 = scmp.ne.s32.totalorder %s35, %s37
      %p41 = scmp.eq.s32.totalorder %s15, 0
      %p42 = por %p40, %p41
      %p43 = scmp.ne.s32.totalorder %s35, %s37
      %p44 = scmp.eq.s32.totalorder %s20, 1
      %p45 = por %p43, %p44
      %p46 = scmp.ne.s32.totalorder %s37, %s38
      %p47 = scmp.eq.s32.totalorder %s20, 0
      %p48 = por %p46, %p47
      %p49 = scmp.ne.s32.totalorder %s37, %s38
      %p50 = scmp.eq.s32.totalorder %s21, 1
      %p51 = por %p49, %p50
      %p53 = scmp.ne.s32.totalorder %s38, %s52
      %p54 = scmp.eq.s32.totalorder %s21, 0
      %p55 = por %p53, %p54
      %s56 = ssub.s32 %s22, %s34
      %s57 = ssub.s32 %s23, %s30
      %s58 = sor.u32 %s56, %s57
      %p59 = scmp.eq.s32.totalorder %s58, 0
      %s61 = sadd.s32 %s60, 1
      %s62 = scalar_select %p59, %s60, %s61
      %p65 = pneg %p59
      %p66 = scmp.eq.s32.totalorder %s15, 1
      %p67 = por %p65, %p66
      %p68 = scmp.ne.s32.totalorder %s60, %s63
      %p69 = scmp.eq.s32.totalorder %s15, 0
      %p70 = por %p68, %p69
      %p71 = scmp.ne.s32.totalorder %s60, %s63
      %p72 = scmp.eq.s32.totalorder %s20, 1
      %p73 = por %p71, %p72
      %p74 = scmp.ne.s32.totalorder %s63, %s64
      %p75 = scmp.eq.s32.totalorder %s20, 0
      %p76 = por %p74, %p75
      %p77 = scmp.ne.s32.totalorder %s63, %s64
      %p78 = scmp.eq.s32.totalorder %s21, 1
      %p79 = por %p77, %p78
      %p81 = scmp.ne.s32.totalorder %s64, %s80
      %p82 = scmp.eq.s32.totalorder %s21, 0
      %p83 = por %p81, %p82
      %s84 = ssub.s32 %s22, %s34
      %s85 = ssub.s32 %s23, %s30
      %s86 = sor.u32 %s84, %s85
      %p87 = scmp.eq.s32.totalorder %s86, 0
      %s89 = sadd.s32 %s88, 1
      %s90 = scalar_select %p87, %s88, %s89
      %p93 = pneg %p87
      %p94 = scmp.eq.s32.totalorder %s15, 1
      %p95 = por %p93, %p94
      %p96 = scmp.ne.s32.totalorder %s88, %s91
      %p97 = scmp.eq.s32.totalorder %s15, 0
      %p98 = por %p96, %p97
      %p99 = scmp.ne.s32.totalorder %s88, %s91
      %p100 = scmp.eq.s32.totalorder %s20, 1
      %p101 = por %p99, %p100
      %p102 = scmp.ne.s32.totalorder %s91, %s92
      %p103 = scmp.eq.s32.totalorder %s20, 0
      %p104 = por %p102, %p103
      %p105 = scmp.ne.s32.totalorder %s91, %s92
      %p106 = scmp.eq.s32.totalorder %s21, 1
      %p107 = por %p105, %p106
      %p109 = scmp.ne.s32.totalorder %s92, %s108
      %p110 = scmp.eq.s32.totalorder %s21, 0
      %p111 = por %p109, %p110
      %p112 = scmp.le.s32.totalorder 1, %s15
      %p113 = scmp.lt.s32.totalorder %s15, 3
      %p114 = pnand %p112, %p113
      %p115 = pneg %p114
      // Predicated region
      $region9: #{tpu_custom_call.1} parent=5 // pred_check
        _
      $region10: #{tpu_custom_call.1} parent=5 // pred_check_branch
        %117 = sbr.rel (%p114) target = $region12
      $region11: #{tpu_custom_call.1} parent=5 // pred_region
        %s118 = ssub.s32 %s15, 1
        // Predicated region
        $region13: #{tpu_custom_call.1} parent=11 // pred_check
          %p119 = pneg %p48
        $region14: #{tpu_custom_call.1} parent=11 // pred_check_branch
          %121 = sbr.rel (%p119) target = $region16
        $region15: #{tpu_custom_call.1} parent=11 // pred_region
          %s123 = ssub.s32 64, 64
          %124 = vsyncadd [#allocation5], %s123
          %127 = dma.hbm_to_smem %s0, 64, [#allocation2], [#allocation5]
        $region16: #{tpu_custom_call.1} parent=11 // pred_fallthru
          _
      $region12: #{tpu_custom_call.1} parent=5 // pred_fallthru
        _
      %p128 = scmp.lt.s32.totalorder %s15, 2
      // Predicated region
      $region17: #{tpu_custom_call.1} parent=5 // pred_check
        %p129 = pneg %p128
      $region18: #{tpu_custom_call.1} parent=5 // pred_check_branch
        %131 = sbr.rel (%p129) target = $region20
      $region19: #{tpu_custom_call.1} parent=5 // pred_region
        // Predicated region
        $region21: #{tpu_custom_call.1} parent=19 // pred_check
          %p132 = pneg %p70
        $region22: #{tpu_custom_call.1} parent=19 // pred_check_branch
          %134 = sbr.rel (%p132) target = $region24
        $region23: #{tpu_custom_call.1} parent=19 // pred_region
          %s135 = sand.u32 %s60, 1
          %s136 = scalar_lea.sflag [#allocation3], %s135
          %s137 = sand.u32 %s60, 1
          %s138 = smul.addr %s137, 32
          %s139 = scalar_lea.vmem [#allocation6], %s138
          %s141 = ssub.s32 512, 512
          %142 = vsyncadd %s136, %s141
          %s143 = smul.addr %s22, 4
          %s144 = sadd.s32 %s23, %s143
          %s145 = smul.addr %s144, 128
          %s146 = scalar_lea.hbm %s1, %s145
          %s147 = sshll.u32 %s139, 4
          %s148 = int_to_ptr.vmem [resolvable:$true] %s147
          %153 = dma.hbm_to_vmem [thread:$0]  %s146, 512, %s148, %s136, 128, 128, 8
        $region24: #{tpu_custom_call.1} parent=19 // pred_fallthru
          _
      $region20: #{tpu_custom_call.1} parent=5 // pred_fallthru
        _
      %p154 = scmp.le.s32.totalorder 1, %s15
      %p155 = scmp.lt.s32.totalorder %s15, 3
      %p156 = pnand %p154, %p155
      %p157 = pneg %p156
      // Predicated region
      $region25: #{tpu_custom_call.1} parent=5 // pred_check
        _
      $region26: #{tpu_custom_call.1} parent=5 // pred_check_branch
        %159 = sbr.rel (%p156) target = $region28
      $region27: #{tpu_custom_call.1} parent=5 // pred_region
        %s160 = ssub.s32 %s15, 1
        // Predicated region
        $region29: #{tpu_custom_call.1} parent=27 // pred_check
          %p161 = pneg %p48
        $region30: #{tpu_custom_call.1} parent=27 // pred_check_branch
          %163 = sbr.rel (%p161) target = $region32
        $region31: #{tpu_custom_call.1} parent=27 // pred_region
          %164 = dma.done [#allocation5], 64
        $region32: #{tpu_custom_call.1} parent=27 // pred_fallthru
          _
        %s165 = sand.u32 %s63, 1
        %s166 = scalar_lea.sflag [#allocation3], %s165
        %s167 = sand.u32 %s63, 1
        %s168 = smul.addr %s167, 32
        %s169 = scalar_lea.vmem [#allocation6], %s168
        // Predicated region
        $region33: #{tpu_custom_call.1} parent=27 // pred_check
          %p170 = pneg %p76
        $region34: #{tpu_custom_call.1} parent=27 // pred_check_branch
          %172 = sbr.rel (%p170) target = $region36
        $region35: #{tpu_custom_call.1} parent=27 // pred_region
          %173 = dma.done %s166, 512
        $region36: #{tpu_custom_call.1} parent=27 // pred_fallthru
          _
        %174 = sfence
        %p175 = pneg %p48
        %p176 = pneg %p45
        %s177 = sand.u32 %s63, 1
        %s178 = scalar_lea.sflag [#allocation3], %s177
        %s179 = sand.u32 %s63, 1
        %s180 = smul.addr %s179, 32
        %s181 = scalar_lea.vmem [#allocation6], %s180
        %p182 = pneg %p76
        %p183 = pneg %p73
        %p184 = pneg %p104
        %p185 = pneg %p101
        %s186 = sand.u32 %s91, 1
        %s187 = scalar_lea.sflag [#allocation4], %s186
        %s188 = sand.u32 %s91, 1
        %s189 = smul.addr %s188, 32
        %s190 = scalar_lea.vmem [#allocation7], %s189
        %s191 = sld [smem:[#allocation2]]
        %v192 = vld [vmem:[%s169] sm:$0xff]
        %v193 = vstv %s191
        %v194 = vmul.f32 %v193, %v192
        %s195 = sld [smem:[#allocation2 + $0x1]]
        %s196 = scalar_lea.vmem %s169, 8 [#allocation6]
        %v197 = vld [vmem:[%s196] sm:$0xff]
        %v198 = vstv %s195
        %v199 = vmul.f32 %v198, %v197
        %v200 = vadd.f32 %v194, %v199
        %s201 = sld [smem:[#allocation2 + $0x2]]
        %s202 = scalar_lea.vmem %s169, 16 [#allocation6]
        %v203 = vld [vmem:[%s202] sm:$0xff]
        %v204 = vstv %s201
        %v205 = vmul.f32 %v204, %v203
        %v206 = vadd.f32 %v200, %v205
        %s207 = sld [smem:[#allocation2 + $0x3]]
        %s208 = scalar_lea.vmem %s169, 24 [#allocation6]
        %v209 = vld [vmem:[%s208] sm:$0xff]
        %v210 = vstv %s207
        %v211 = vmul.f32 %v210, %v209
        %v212 = vadd.f32 %v206, %v211
        %vm213 = vcmask 261120
        %214 = vst.msk [vmem:[%s190] sm:$0xff] %vm213, %v212
        %s215 = sld [smem:[#allocation2 + $0x80]]
        %v216 = vld [vmem:[%s169] sm:$0xff]
        %v217 = vstv %s215
        %v218 = vmul.f32 %v217, %v216
        %s219 = sld [smem:[#allocation2 + $0x81]]
        %v220 = vld [vmem:[%s196] sm:$0xff]
        %v221 = vstv %s219
        %v222 = vmul.f32 %v221, %v220
        %v223 = vadd.f32 %v218, %v222
        %s224 = sld [smem:[#allocation2 + $0x82]]
        %v225 = vld [vmem:[%s202] sm:$0xff]
        %v226 = vstv %s224
        %v227 = vmul.f32 %v226, %v225
        %v228 = vadd.f32 %v223, %v227
        %s229 = sld [smem:[#allocation2 + $0x83]]
        %v230 = vld [vmem:[%s208] sm:$0xff]
        %v231 = vstv %s229
        %v232 = vmul.f32 %v231, %v230
        %v233 = vadd.f32 %v228, %v232
        %s234 = scalar_lea.vmem %s190, 8 [#allocation7]
        %235 = vst.msk [vmem:[%s234] sm:$0xff] %vm213, %v233
        %s236 = sld [smem:[#allocation2 + $0x100]]
        %v237 = vld [vmem:[%s169] sm:$0xff]
        %v238 = vstv %s236
        %v239 = vmul.f32 %v238, %v237
        %s240 = sld [smem:[#allocation2 + $0x101]]
        %v241 = vld [vmem:[%s196] sm:$0xff]
        %v242 = vstv %s240
        %v243 = vmul.f32 %v242, %v241
        %v244 = vadd.f32 %v239, %v243
        %s245 = sld [smem:[#allocation2 + $0x102]]
        %v246 = vld [vmem:[%s202] sm:$0xff]
        %v247 = vstv %s245
        %v248 = vmul.f32 %v247, %v246
        %v249 = vadd.f32 %v244, %v248
        %s250 = sld [smem:[#allocation2 + $0x103]]
        %v251 = vld [vmem:[%s208] sm:$0xff]
        %v252 = vstv %s250
        %v253 = vmul.f32 %v252, %v251
        %v254 = vadd.f32 %v249, %v253
        %s255 = scalar_lea.vmem %s190, 16 [#allocation7]
        %256 = vst.msk [vmem:[%s255] sm:$0xff] %vm213, %v254
        %s257 = sld [smem:[#allocation2 + $0x180]]
        %v258 = vld [vmem:[%s169] sm:$0xff]
        %v259 = vstv %s257
        %v260 = vmul.f32 %v259, %v258
        %s261 = sld [smem:[#allocation2 + $0x181]]
        %v262 = vld [vmem:[%s196] sm:$0xff]
        %v263 = vstv %s261
        %v264 = vmul.f32 %v263, %v262
        %v265 = vadd.f32 %v260, %v264
        %s266 = sld [smem:[#allocation2 + $0x182]]
        %v267 = vld [vmem:[%s202] sm:$0xff]
        %v268 = vstv %s266
        %v269 = vmul.f32 %v268, %v267
        %v270 = vadd.f32 %v265, %v269
        %s271 = sld [smem:[#allocation2 + $0x183]]
        %v272 = vld [vmem:[%s208] sm:$0xff]
        %v273 = vstv %s271
        %v274 = vmul.f32 %v273, %v272
        %v275 = vadd.f32 %v270, %v274
        %s276 = scalar_lea.vmem %s190, 24 [#allocation7]
        %277 = vst.msk [vmem:[%s276] sm:$0xff] %vm213, %v275
        %s278 = sand.u32 %s91, 1
        %s279 = scalar_lea.sflag [#allocation4], %s278
        %s280 = sand.u32 %s91, 1
        %s281 = smul.addr %s280, 32
        %s282 = scalar_lea.vmem [#allocation7], %s281
        // Predicated region
        $region37: #{tpu_custom_call.1} parent=27 // pred_check
          %p283 = pneg %p101
        $region38: #{tpu_custom_call.1} parent=27 // pred_check_branch
          %285 = sbr.rel (%p283) target = $region40
        $region39: #{tpu_custom_call.1} parent=27 // pred_region
          %s287 = ssub.s32 512, 512
          %288 = vsyncadd %s279, %s287
          %s289 = smul.addr %s24, 4
          %s290 = sadd.s32 %s25, %s289
          %s291 = smul.addr %s290, 128
          %s292 = scalar_lea.hbm %s2, %s291
          %s293 = sshll.u32 %s282, 4
          %s294 = int_to_ptr.vmem [resolvable:$true] %s293
          %299 = dma.vmem_to_hbm [thread:$0]  %s294, 512, %s292, %s279, 128, 128, 8
        $region40: #{tpu_custom_call.1} parent=27 // pred_fallthru
          _
      $region28: #{tpu_custom_call.1} parent=5 // pred_fallthru
        _
      %p300 = scmp.le.s32.totalorder 2, %s15
      // Predicated region
      $region41: #{tpu_custom_call.1} parent=5 // pred_check
        %p301 = pneg %p300
      $region42: #{tpu_custom_call.1} parent=5 // pred_check_branch
        %303 = sbr.rel (%p301) target = $region44
      $region43: #{tpu_custom_call.1} parent=5 // pred_region
        %s304 = ssub.s32 %s15, 2
        // Predicated region
        $region45: #{tpu_custom_call.1} parent=43 // pred_check
          %p305 = pneg %p107
        $region46: #{tpu_custom_call.1} parent=43 // pred_check_branch
          %307 = sbr.rel (%p305) target = $region48
        $region47: #{tpu_custom_call.1} parent=43 // pred_region
          %s308 = sand.u32 %s92, 1
          %s309 = scalar_lea.sflag [#allocation4], %s308
          %s310 = sand.u32 %s92, 1
          %s311 = smul.addr %s310, 32
          %s312 = scalar_lea.vmem [#allocation7], %s311
          %313 = dma.done %s309, 512
        $region48: #{tpu_custom_call.1} parent=43 // pred_fallthru
          _
      $region44: #{tpu_custom_call.1} parent=5 // pred_fallthru
        _
    $region6: #{tpu_custom_call.1} parent=1 // loop_footer
      %s19 = sadd.s32 1, %s15
    $region7: #{tpu_custom_call.1} parent=1 // loop_footer_branch
      %14 = sbr.rel target = $region3
    $region8: #{tpu_custom_call.1} parent=1 // loop_exit
      _
    %314 = vsyncpa [#allocation3], 1
    %s315 = scalar_lea.sflag [#allocation3], 1
    %316 = vsyncpa %s315, 1
    %317 = vsyncpa [#allocation4], 1
    %s318 = scalar_lea.sflag [#allocation4], 1
    %319 = vsyncpa %s318, 1
    %320 = vsyncpa [#allocation5], 1
    %s321 = scalar_lea.sflag [#allocation5], 1
    %322 = vsyncpa %s321, 1

</llo_original>
